<compile_context>
chip_gen: v7x
topology: tpu7x:2x2x1
jax: 0.10.0
libtpu: 0.0.40
codegen_flags: <defaults>
</compile_context>

<pallas_src>
import functools

import jax
import jax.numpy as jnp
from jax.experimental import pallas as pl
from jax.experimental.pallas import tpu as pltpu

EPS = 1e-5  # PyTorch BatchNorm1d default eps

# TODO(synk): BatchNorm1d running_mean/running_var buffer updates (module state) are not
# emitted; this is a forward-only kernel using training-mode batch statistics.


def _matmul_stats_kernel(x_ref, w_ref, gamma_ref, beta_ref, h_ref, ss_ref, acc_ref, *, inv_n):
    """Pass 1: per-batch-tile matmul + running (sum, sumsq) accumulation.

    Grid axis 0 iterates batch tiles and is a reduction axis for the stats
    accumulator, so it is marked "arbitrary".
    On the last tile the fused BN affine (scale, shift) is written to ss_ref.
    """
    # Init the persistent accumulator on the first batch tile.
    @pl.when(pl.program_id(0) == 0)
    def _():
        acc_ref[...] = jnp.zeros_like(acc_ref)

    x = x_ref[...].astype(jnp.float32)                                  # (bm, I)
    # Linear WITHOUT bias: training-mode BatchNorm subtracts the batch mean of h,
    # so the fc bias cancels exactly and never needs to be loaded.
    h = jnp.dot(x, w_ref[...], preferred_element_type=jnp.float32)      # (bm, O), MXU
    h_ref[...] = h                                                      # stream h tile to HBM

    # Per-column partial sums (axis-0 sublane reduction -> XLU, cheap).
    s = jnp.sum(h, axis=0, keepdims=True)                               # (1, O)
    sq = jnp.sum(h * h, axis=0, keepdims=True)                          # (1, O)
    acc_ref[...] = acc_ref[...] + jnp.concatenate([s, sq], axis=0)      # (2, O)

    # Epilogue on the last batch tile: fold stats + gamma/beta into (scale, shift).
    @pl.when(pl.program_id(0) == pl.num_programs(0) - 1)
    def _():
        acc = acc_ref[...]
        mean = acc[0:1, :] * inv_n                                      # (1, O)
        var = acc[1:2, :] * inv_n - mean * mean                         # biased variance
        inv_std = jax.lax.rsqrt(var + EPS)                              # EUP slot
        scale = gamma_ref[...] * inv_std                                # (1, O)
        shift = beta_ref[...] - mean * scale                            # (1, O)
        ss_ref[...] = jnp.concatenate([scale, shift], axis=0)           # (2, O)


def _bn_relu_kernel(h_ref, ss_ref, y_ref):
    """Pass 2: y = relu(h * scale + shift), one FMA + max per element (VPU)."""
    ss = ss_ref[...]                                                    # (2, O)
    y = h_ref[...] * ss[0:1, :] + ss[1:2, :]
    y_ref[...] = jnp.maximum(y, 0.0).astype(y_ref.dtype)


def residual_forward(x, w, b, gamma, beta, *, block_b=None):
    """Forward of Residual(i, o): concat([relu(bn(fc(x))), x], axis=1).

    `b` (the Linear bias) is accepted for parity with the PyTorch module but is
    mathematically cancelled by training-mode BatchNorm, so it is not used.
    """
    del b  # cancelled by the batch-mean subtraction inside BatchNorm (training mode)

    B, I = x.shape
    O = w.shape[1]

    if block_b is None:
        block_b = B if B <= 512 else 512
    assert B % block_b == 0, "batch size must be divisible by the batch tile"
    assert block_b == B or block_b % 8 == 0, "sub-batch tiles must be sublane (8) aligned"
    nbt = B // block_b

    # ---- Pass 1: x @ W per batch tile + full-batch stats -> fused (scale, shift) ----
    h, ss = pl.pallas_call(
        functools.partial(_matmul_stats_kernel, inv_n=1.0 / float(B)),
        out_shape=(
            jax.ShapeDtypeStruct((B, O), jnp.float32),   # h = x @ W
            jax.ShapeDtypeStruct((2, O), jnp.float32),   # row 0: scale, row 1: shift
        ),
        grid=(nbt,),
        in_specs=[
            pl.BlockSpec((block_b, I), lambda i: (i, 0)),   # x tile
            pl.BlockSpec((I, O), lambda i: (0, 0)),         # W (resident)
            pl.BlockSpec((1, O), lambda i: (0, 0)),         # gamma
            pl.BlockSpec((1, O), lambda i: (0, 0)),         # beta
        ],
        out_specs=(
            pl.BlockSpec((block_b, O), lambda i: (i, 0)),   # h tile (lane-dense per-output write)
            pl.BlockSpec((2, O), lambda i: (0, 0)),         # stats (written once at the end)
        ),
        scratch_shapes=[pltpu.VMEM((2, O), jnp.float32)],   # persistent sum / sumsq accumulator
        compiler_params=pltpu.CompilerParams(
            dimension_semantics=("arbitrary",),             # reduction over batch tiles
            vmem_limit_bytes=32 * 1024 * 1024,              # fits v7x's 64 MiB per-TC VMEM
        ),
    )(x, w, gamma, beta)

    # ---- Pass 2: normalize + affine + ReLU per batch tile (embarrassingly parallel) ----
    y = pl.pallas_call(
        _bn_relu_kernel,
        out_shape=jax.ShapeDtypeStruct((B, O), jnp.float32),
        grid=(nbt,),
        in_specs=[
            pl.BlockSpec((block_b, O), lambda i: (i, 0)),   # h tile
            pl.BlockSpec((2, O), lambda i: (0, 0)),         # (scale, shift)
        ],
        out_specs=pl.BlockSpec((block_b, O), lambda i: (i, 0)),
        compiler_params=pltpu.CompilerParams(
            dimension_semantics=("parallel",),              # megacore sharding on v7x
            vmem_limit_bytes=32 * 1024 * 1024,
        ),
    )(h, ss)

    # torch.cat([out, input], dim=1) — done in the wrapper so the kernels only ever
    # write lane-dense slabs (no in-kernel cross-lane concat / masked O+I-wide store).
    return jnp.concatenate([y, x.astype(jnp.float32)], axis=1)


if __name__ == "__main__":
    key = jax.random.PRNGKey(0)
    B, I, O = 64, 32, 16        # small shapes; block_b=32 exercises the 2-step batch grid

    kx, kw, kb, kg, kbe = jax.random.split(key, 5)
    x = jax.random.normal(kx, (B, I), dtype=jnp.float32)

    # Deterministic synthetic parameters (shapes from Linear(i, o) / BatchNorm1d(o)).
    bound = 1.0 / jnp.sqrt(jnp.float32(I))
    w = jax.random.uniform(kw, (I, O), minval=-bound, maxval=bound, dtype=jnp.float32)
    b = jax.random.uniform(kb, (1, O), minval=-bound, maxval=bound, dtype=jnp.float32)
    gamma = jnp.ones((1, O), dtype=jnp.float32) + 0.1 * jax.random.normal(kg, (1, O), dtype=jnp.float32)
    beta = 0.1 * jax.random.normal(kbe, (1, O), dtype=jnp.float32)

    out = residual_forward(x, w, b, gamma, beta, block_b=32)
    out = jax.block_until_ready(out)

    # Pure-JAX reference (same semantics as PyTorch training-mode forward, bias included).
    h = x @ w + b
    mean = h.mean(axis=0, keepdims=True)
    var = ((h - mean) ** 2).mean(axis=0, keepdims=True)
    ref = jnp.concatenate(
        [jnp.maximum(gamma * (h - mean) / jnp.sqrt(var + EPS) + beta, 0.0), x], axis=1
    )
    assert out.shape == (B, O + I)
    assert jnp.allclose(out, ref, atol=1e-5, rtol=1e-5)

    print("KERNEL_OK")
</pallas_src>

<mosaic_0001>
module attributes {stable_mosaic.version = 11 : i64} {
  func.func @_matmul_stats_kernel(%arg0: i32, %arg1: memref<32x32xf32, #tpu.memory_space<vmem>>, %arg2: memref<32x16xf32, #tpu.memory_space<vmem>>, %arg3: memref<1x16xf32, #tpu.memory_space<vmem>>, %arg4: memref<1x16xf32, #tpu.memory_space<vmem>>, %arg5: memref<32x16xf32, #tpu.memory_space<vmem>>, %arg6: memref<2x16xf32, #tpu.memory_space<vmem>>, %arg7: memref<2x16xf32, #tpu.memory_space<vmem>>) attributes {dimension_semantics = [#tpu.dimension_semantics<arbitrary>], iteration_bounds = array<i64: 2>, scalar_prefetch = 0 : i64, scratch_operands = 1 : i64, tpu.core_type = #tpu.core_type<tc>, window_params = [{transform_indices = @transform_0, window_bounds = array<i64: 32, 32>}, {pipeline_mode = #tpu.pipeline_mode<synchronous>, transform_indices = @transform_1, window_bounds = array<i64: 32, 16>}, {pipeline_mode = #tpu.pipeline_mode<synchronous>, transform_indices = @transform_2, window_bounds = array<i64: 1, 16>}, {pipeline_mode = #tpu.pipeline_mode<synchronous>, transform_indices = @transform_3, window_bounds = array<i64: 1, 16>}, {transform_indices = @transform_4, window_bounds = array<i64: 32, 16>}, {pipeline_mode = #tpu.pipeline_mode<synchronous>, transform_indices = @transform_5, window_bounds = array<i64: 2, 16>}]} {
    %c0_i32 = arith.constant 0 : i32
    %0 = arith.cmpi eq, %arg0, %c0_i32 : i32
    %1 = arith.extui %0 : i1 to i32
    %c0_i32_0 = arith.constant 0 : i32
    %2 = arith.cmpi ne, %1, %c0_i32_0 : i32
    scf.if %2 {
      %cst_13 = arith.constant 0.000000e+00 : f32
      %19 = vector.broadcast %cst_13 : f32 to vector<2x16xf32>
      %c0_14 = arith.constant 0 : index
      %c0_15 = arith.constant 0 : index
      %20 = vector.load %arg7[%c0_14, %c0_15] : memref<2x16xf32, #tpu.memory_space<vmem>>, vector<2x16xf32>
      tpu.vector_store %arg7[%c0_14, %c0_15], %19 {strides = array<i32>} : memref<2x16xf32, #tpu.memory_space<vmem>>, vector<2x16xf32>,
    } else {
    }
    %c0 = arith.constant 0 : index
    %c0_1 = arith.constant 0 : index
    %3 = vector.load %arg1[%c0, %c0_1] : memref<32x32xf32, #tpu.memory_space<vmem>>, vector<32x32xf32>
    %c0_2 = arith.constant 0 : index
    %c0_3 = arith.constant 0 : index
    %4 = vector.load %arg2[%c0_2, %c0_3] : memref<32x16xf32, #tpu.memory_space<vmem>>, vector<32x16xf32>
    %cst = arith.constant dense<0.000000e+00> : vector<32x16xf32>
    %5 = tpu.matmul %3, %4, %cst {dimension_numbers = #tpu.dot_dimension_numbers<[1], [0], [0], [1], [0, 0, 1, 1], [], []>} : vector<32x32xf32>, vector<32x16xf32>, vector<32x16xf32> -> vector<32x16xf32>
    %c0_4 = arith.constant 0 : index
    %c0_5 = arith.constant 0 : index
    %6 = vector.load %arg5[%c0_4, %c0_5] : memref<32x16xf32, #tpu.memory_space<vmem>>, vector<32x16xf32>
    tpu.vector_store %arg5[%c0_4, %c0_5], %5 {strides = array<i32>} : memref<32x16xf32, #tpu.memory_space<vmem>>, vector<32x16xf32>,
    %cst_6 = arith.constant dense<0.000000e+00> : vector<16xf32>
    %7 = vector.multi_reduction <add>, %5, %cst_6 [0] : vector<32x16xf32> to vector<16xf32>
    %8 = vector.shape_cast %7 : vector<16xf32> to vector<1x16xf32>
    %9 = arith.mulf %5, %5 : vector<32x16xf32>
    %cst_7 = arith.constant dense<0.000000e+00> : vector<16xf32>
    %10 = vector.multi_reduction <add>, %9, %cst_7 [0] : vector<32x16xf32> to vector<16xf32>
    %11 = vector.shape_cast %10 : vector<16xf32> to vector<1x16xf32>
    %c0_8 = arith.constant 0 : index
    %c0_9 = arith.constant 0 : index
    %12 = vector.load %arg7[%c0_8, %c0_9] : memref<2x16xf32, #tpu.memory_space<vmem>>, vector<2x16xf32>
    %13 = tpu.concatenate %8, %11 in 0 : vector<1x16xf32>, vector<1x16xf32> -> vector<2x16xf32>
    %14 = arith.addf %12, %13 : vector<2x16xf32>
    %c0_10 = arith.constant 0 : index
    %c0_11 = arith.constant 0 : index
    %15 = vector.load %arg7[%c0_10, %c0_11] : memref<2x16xf32, #tpu.memory_space<vmem>>, vector<2x16xf32>
    tpu.vector_store %arg7[%c0_10, %c0_11], %14 {strides = array<i32>} : memref<2x16xf32, #tpu.memory_space<vmem>>, vector<2x16xf32>,
    %c1_i32 = arith.constant 1 : i32
    %16 = arith.cmpi eq, %arg0, %c1_i32 : i32
    %17 = arith.extui %16 : i1 to i32
    %c0_i32_12 = arith.constant 0 : i32
    %18 = arith.cmpi ne, %17, %c0_i32_12 : i32
    scf.if %18 {
      %c0_13 = arith.constant 0 : index
      %c0_14 = arith.constant 0 : index
      %19 = vector.load %arg7[%c0_13, %c0_14] : memref<2x16xf32, #tpu.memory_space<vmem>>, vector<2x16xf32>
      %20 = vector.extract_strided_slice %19 {offsets = [0, 0], sizes = [1, 16], strides = [1, 1]} : vector<2x16xf32> to vector<1x16xf32>
      %cst_15 = arith.constant 1.562500e-02 : f32
      %21 = vector.broadcast %cst_15 : f32 to vector<1x16xf32>
      %22 = arith.mulf %20, %21 : vector<1x16xf32>
      %23 = vector.extract_strided_slice %19 {offsets = [1, 0], sizes = [1, 16], strides = [1, 1]} : vector<2x16xf32> to vector<1x16xf32>
      %cst_16 = arith.constant 1.562500e-02 : f32
      %24 = vector.broadcast %cst_16 : f32 to vector<1x16xf32>
      %25 = arith.mulf %23, %24 : vector<1x16xf32>
      %26 = arith.mulf %22, %22 : vector<1x16xf32>
      %27 = arith.subf %25, %26 : vector<1x16xf32>
      %cst_17 = arith.constant 9.99999974E-6 : f32
      %28 = vector.broadcast %cst_17 : f32 to vector<1x16xf32>
      %29 = arith.addf %27, %28 : vector<1x16xf32>
      %30 = math.rsqrt %29 : vector<1x16xf32>
      %c0_18 = arith.constant 0 : index
      %c0_19 = arith.constant 0 : index
      %31 = vector.load %arg3[%c0_18, %c0_19] : memref<1x16xf32, #tpu.memory_space<vmem>>, vector<1x16xf32>
      %32 = arith.mulf %31, %30 : vector<1x16xf32>
      %c0_20 = arith.constant 0 : index
      %c0_21 = arith.constant 0 : index
      %33 = vector.load %arg4[%c0_20, %c0_21] : memref<1x16xf32, #tpu.memory_space<vmem>>, vector<1x16xf32>
      %34 = arith.mulf %22, %32 : vector<1x16xf32>
      %35 = arith.subf %33, %34 : vector<1x16xf32>
      %36 = tpu.concatenate %32, %35 in 0 : vector<1x16xf32>, vector<1x16xf32> -> vector<2x16xf32>
      %c0_22 = arith.constant 0 : index
      %c0_23 = arith.constant 0 : index
      %37 = vector.load %arg6[%c0_22, %c0_23] : memref<2x16xf32, #tpu.memory_space<vmem>>, vector<2x16xf32>
      tpu.vector_store %arg6[%c0_22, %c0_23], %36 {strides = array<i32>} : memref<2x16xf32, #tpu.memory_space<vmem>>, vector<2x16xf32>,
    } else {
    }
    return
  }
  func.func @transform_0(%arg0: i32) -> (i32, i32) {
    %c0_i32 = arith.constant 0 : i32
    %c0_i32_0 = arith.constant 0 : i32
    return %arg0, %c0_i32 : i32, i32
  }
  func.func @transform_1(%arg0: i32) -> (i32, i32) {
    %c0_i32 = arith.constant 0 : i32
    %c0_i32_0 = arith.constant 0 : i32
    %c0_i32_1 = arith.constant 0 : i32
    return %c0_i32, %c0_i32_0 : i32, i32
  }
  func.func @transform_2(%arg0: i32) -> (i32, i32) {
    %c0_i32 = arith.constant 0 : i32
    %c0_i32_0 = arith.constant 0 : i32
    %c0_i32_1 = arith.constant 0 : i32
    return %c0_i32, %c0_i32_0 : i32, i32
  }
  func.func @transform_3(%arg0: i32) -> (i32, i32) {
    %c0_i32 = arith.constant 0 : i32
    %c0_i32_0 = arith.constant 0 : i32
    %c0_i32_1 = arith.constant 0 : i32
    return %c0_i32, %c0_i32_0 : i32, i32
  }
  func.func @transform_4(%arg0: i32) -> (i32, i32) {
    %c0_i32 = arith.constant 0 : i32
    %c0_i32_0 = arith.constant 0 : i32
    return %arg0, %c0_i32 : i32, i32
  }
  func.func @transform_5(%arg0: i32) -> (i32, i32) {
    %c0_i32 = arith.constant 0 : i32
    %c0_i32_0 = arith.constant 0 : i32
    %c0_i32_1 = arith.constant 0 : i32
    return %c0_i32, %c0_i32_0 : i32, i32
  }
}

</mosaic_0001>

<llo_original>
// kernel: tpu_custom_call.1
$region0: #{tpu_custom_call.1}
  #allocation0 [shape = 'u32[]', space=smem, size = 0x4, offset = 0x4, fixed_abs, tag = 'smem constant byte address 0x4 - core index']
  #allocation1 [shape = 'u32[144,128]{1,0:T(1,128)}', space=vmem, size = 0x12000, scoped, tag = 'internal scratch']
  #allocation2 [shape = 'f32[2,16]{1,0:T(2,128)}', space=vmem, size = 0x400, scoped, tag = 'scratch operand']
  %s0 = inlined_call_operand.vmem [shape: f32[64,32], index: 0, kind: input, shape index: {}]
  %s1 = inlined_call_operand.vmem [shape: f32[32,16], index: 1, kind: input, shape index: {}]
  %s2 = inlined_call_operand.vmem [shape: f32[1,16], index: 2, kind: input, shape index: {}]
  %s3 = inlined_call_operand.vmem [shape: f32[1,16], index: 3, kind: input, shape index: {}]
  %s4 = inlined_call_operand.vmem [shape: f32[64,16], index: 4, kind: output, shape index: {0}]
  %s5 = inlined_call_operand.hbm [shape: f32[2,16], index: 5, kind: output, shape index: {1}]
  %6 = xla_tuple %s4, %s5
  %s7 = sld [smem:[#allocation0]]
  $region65: #{tpu_custom_call.1} parent=0
    _
  %s9 = ssub.s32 1, %s7
  %s10 = scalar_select 0, %s9, %s7
  $region1: #{tpu_custom_call.1} parent=0
    #allocation3 [shape = 'u8[1024]{0}', space=vmem, size = 0x400, scoped, tag = 'output window, operand 1, single buffered']
    #allocation4 [shape = 's32[2]{0}', space=sflag, size = 0x8, scoped, tag = 'scoped memory for tpu_custom_call.1']
    %11 = vsyncpa [#allocation4], 0
    loop: start=0, step=1, limit=4
    $region2: #{tpu_custom_call.1} parent=1 // loop_pre_header
      _
    $region3: #{tpu_custom_call.1} parent=1 // loop_header
      %s13 = sphi 0, %s17
      %p14 = scmp.ge.s32.totalorder %s13, 4
      %s23 = sphi 0, %s25
      %s26 = sphi 0, %s23
      %s27 = sphi 0, %s26
      %s43 = sphi 0, %s27
      %s47 = sphi 0, %s47
      %s49 = sphi 0, %s47
      %s50 = sphi 0, %s49
      %s64 = sphi 0, %s50
      %s68 = sphi 0, %s68
      %s70 = sphi 0, %s68
      %s71 = sphi 0, %s70
      %s85 = sphi 0, %s71
      %s89 = sphi 0, %s89
      %s91 = sphi 0, %s89
      %s92 = sphi 0, %s91
      %s106 = sphi 0, %s92
      %s112 = sphi 0, %s114
      %s115 = sphi 0, %s112
      %s116 = sphi 0, %s115
      %s132 = sphi 0, %s116
      %s136 = sphi 0, %s136
      %s138 = sphi 0, %s136
      %s139 = sphi 0, %s138
      %s153 = sphi 0, %s139
    $region4: #{tpu_custom_call.1} parent=1 // loop_header_branch
      %16 = sbr.rel (%p14) target = $region8
    $region5: #{tpu_custom_call.1} parent=1 // loop_body
      %s18 = ssub.s32 %s13, 1
      %s19 = ssub.s32 %s13, 2
      %s20 = sadd.s32 %s13, 1
      %s21 = ssub.s32 %s13, %s20
      %p22 = scmp.eq.s32.totalorder %s21, 0
      %s24 = sadd.s32 %s23, 1
      %s25 = scalar_select %p22, %s23, %s24
      %p28 = pneg %p22
      %p29 = scmp.eq.s32.totalorder %s13, 1
      %p30 = por %p28, %p29
      %p31 = scmp.ne.s32.totalorder %s23, %s26
      %p32 = scmp.eq.s32.totalorder %s13, 0
      %p33 = por %p31, %p32
      %p34 = scmp.ne.s32.totalorder %s23, %s26
      %p35 = scmp.eq.s32.totalorder %s18, 1
      %p36 = por %p34, %p35
      %p37 = scmp.ne.s32.totalorder %s26, %s27
      %p38 = scmp.eq.s32.totalorder %s18, 0
      %p39 = por %p37, %p38
      %p40 = scmp.ne.s32.totalorder %s26, %s27
      %p41 = scmp.eq.s32.totalorder %s19, 1
      %p42 = por %p40, %p41
      %p44 = scmp.ne.s32.totalorder %s27, %s43
      %p45 = scmp.eq.s32.totalorder %s19, 0
      %p46 = por %p44, %p45
      %s48 = sadd.s32 %s47, 1
      %p51 = scmp.eq.s32.totalorder %s13, 1
      %p52 = scmp.ne.s32.totalorder %s47, %s49
      %p53 = scmp.eq.s32.totalorder %s13, 0
      %p54 = por %p52, %p53
      %p55 = scmp.ne.s32.totalorder %s47, %s49
      %p56 = scmp.eq.s32.totalorder %s18, 1
      %p57 = por %p55, %p56
      %p58 = scmp.ne.s32.totalorder %s49, %s50
      %p59 = scmp.eq.s32.totalorder %s18, 0
      %p60 = por %p58, %p59
      %p61 = scmp.ne.s32.totalorder %s49, %s50
      %p62 = scmp.eq.s32.totalorder %s19, 1
      %p63 = por %p61, %p62
      %p65 = scmp.ne.s32.totalorder %s50, %s64
      %p66 = scmp.eq.s32.totalorder %s19, 0
      %p67 = por %p65, %p66
      %s69 = sadd.s32 %s68, 1
      %p72 = scmp.eq.s32.totalorder %s13, 1
      %p73 = scmp.ne.s32.totalorder %s68, %s70
      %p74 = scmp.eq.s32.totalorder %s13, 0
      %p75 = por %p73, %p74
      %p76 = scmp.ne.s32.totalorder %s68, %s70
      %p77 = scmp.eq.s32.totalorder %s18, 1
      %p78 = por %p76, %p77
      %p79 = scmp.ne.s32.totalorder %s70, %s71
      %p80 = scmp.eq.s32.totalorder %s18, 0
      %p81 = por %p79, %p80
      %p82 = scmp.ne.s32.totalorder %s70, %s71
      %p83 = scmp.eq.s32.totalorder %s19, 1
      %p84 = por %p82, %p83
      %p86 = scmp.ne.s32.totalorder %s71, %s85
      %p87 = scmp.eq.s32.totalorder %s19, 0
      %p88 = por %p86, %p87
      %s90 = sadd.s32 %s89, 1
      %p93 = scmp.eq.s32.totalorder %s13, 1
      %p94 = scmp.ne.s32.totalorder %s89, %s91
      %p95 = scmp.eq.s32.totalorder %s13, 0
      %p96 = por %p94, %p95
      %p97 = scmp.ne.s32.totalorder %s89, %s91
      %p98 = scmp.eq.s32.totalorder %s18, 1
      %p99 = por %p97, %p98
      %p100 = scmp.ne.s32.totalorder %s91, %s92
      %p101 = scmp.eq.s32.totalorder %s18, 0
      %p102 = por %p100, %p101
      %p103 = scmp.ne.s32.totalorder %s91, %s92
      %p104 = scmp.eq.s32.totalorder %s19, 1
      %p105 = por %p103, %p104
      %p107 = scmp.ne.s32.totalorder %s92, %s106
      %p108 = scmp.eq.s32.totalorder %s19, 0
      %p109 = por %p107, %p108
      %s110 = ssub.s32 %s13, %s20
      %p111 = scmp.eq.s32.totalorder %s110, 0
      %s113 = sadd.s32 %s112, 1
      %s114 = scalar_select %p111, %s112, %s113
      %p117 = pneg %p111
      %p118 = scmp.eq.s32.totalorder %s13, 1
      %p119 = por %p117, %p118
      %p120 = scmp.ne.s32.totalorder %s112, %s115
      %p121 = scmp.eq.s32.totalorder %s13, 0
      %p122 = por %p120, %p121
      %p123 = scmp.ne.s32.totalorder %s112, %s115
      %p124 = scmp.eq.s32.totalorder %s18, 1
      %p125 = por %p123, %p124
      %p126 = scmp.ne.s32.totalorder %s115, %s116
      %p127 = scmp.eq.s32.totalorder %s18, 0
      %p128 = por %p126, %p127
      %p129 = scmp.ne.s32.totalorder %s115, %s116
      %p130 = scmp.eq.s32.totalorder %s19, 1
      %p131 = por %p129, %p130
      %p133 = scmp.ne.s32.totalorder %s116, %s132
      %p134 = scmp.eq.s32.totalorder %s19, 0
      %p135 = por %p133, %p134
      %s137 = sadd.s32 %s136, 1
      %p140 = scmp.eq.s32.totalorder %s13, 1
      %p141 = scmp.ne.s32.totalorder %s136, %s138
      %p142 = scmp.eq.s32.totalorder %s13, 0
      %p143 = por %p141, %p142
      %p144 = scmp.ne.s32.totalorder %s136, %s138
      %p145 = scmp.eq.s32.totalorder %s18, 1
      %p146 = por %p144, %p145
      %p147 = scmp.ne.s32.totalorder %s138, %s139
      %p148 = scmp.eq.s32.totalorder %s18, 0
      %p149 = por %p147, %p148
      %p150 = scmp.ne.s32.totalorder %s138, %s139
      %p151 = scmp.eq.s32.totalorder %s19, 1
      %p152 = por %p150, %p151
      %p154 = scmp.ne.s32.totalorder %s139, %s153
      %p155 = scmp.eq.s32.totalorder %s19, 0
      %p156 = por %p154, %p155
      %p157 = scmp.le.s32.totalorder 1, %s13
      %p158 = scmp.lt.s32.totalorder %s13, 3
      %p159 = pnand %p157, %p158
      %p160 = pneg %p159
      // Predicated region
      $region9: #{tpu_custom_call.1} parent=5 // pred_check
        _
      $region10: #{tpu_custom_call.1} parent=5 // pred_check_branch
        %162 = sbr.rel (%p159) target = $region12
      $region11: #{tpu_custom_call.1} parent=5 // pred_region
        %s163 = ssub.s32 %s13, 1
        // Predicated region
        $region13: #{tpu_custom_call.1} parent=11 // pred_check
          %p164 = pneg %p60
        $region14: #{tpu_custom_call.1} parent=11 // pred_check_branch
          %166 = sbr.rel (%p164) target = $region16
        $region15: #{tpu_custom_call.1} parent=11 // pred_region
          _
        $region16: #{tpu_custom_call.1} parent=11 // pred_fallthru
          _
        // Predicated region
        $region17: #{tpu_custom_call.1} parent=11 // pred_check
          %p167 = pneg %p81
        $region18: #{tpu_custom_call.1} parent=11 // pred_check_branch
          %169 = sbr.rel (%p167) target = $region20
        $region19: #{tpu_custom_call.1} parent=11 // pred_region
          _
        $region20: #{tpu_custom_call.1} parent=11 // pred_fallthru
          _
        // Predicated region
        $region21: #{tpu_custom_call.1} parent=11 // pred_check
          %p170 = pneg %p102
        $region22: #{tpu_custom_call.1} parent=11 // pred_check_branch
          %172 = sbr.rel (%p170) target = $region24
        $region23: #{tpu_custom_call.1} parent=11 // pred_region
          _
        $region24: #{tpu_custom_call.1} parent=11 // pred_fallthru
          _
      $region12: #{tpu_custom_call.1} parent=5 // pred_fallthru
        _
      %p173 = scmp.lt.s32.totalorder %s13, 2
      // Predicated region
      $region25: #{tpu_custom_call.1} parent=5 // pred_check
        %p174 = pneg %p173
      $region26: #{tpu_custom_call.1} parent=5 // pred_check_branch
        %176 = sbr.rel (%p174) target = $region28
      $region27: #{tpu_custom_call.1} parent=5 // pred_region
        // Predicated region
        $region29: #{tpu_custom_call.1} parent=27 // pred_check
          %p177 = pneg %p33
        $region30: #{tpu_custom_call.1} parent=27 // pred_check_branch
          %179 = sbr.rel (%p177) target = $region32
        $region31: #{tpu_custom_call.1} parent=27 // pred_region
          %s180 = smul.u32 4, %s13
          %p181 = scmp.lt.s32.totalorder %s180, 7
          %s182 = scalar_select %p181, %s180, 7
          %s183 = smul.addr %s182, 8
          %s184 = scalar_lea.vmem %s0, %s183
          %s185 = smul.u32 4, %s13
        $region32: #{tpu_custom_call.1} parent=27 // pred_fallthru
          _
      $region28: #{tpu_custom_call.1} parent=5 // pred_fallthru
        _
      %p186 = scmp.le.s32.totalorder 1, %s13
      %p187 = scmp.lt.s32.totalorder %s13, 3
      %p188 = pnand %p186, %p187
      %p189 = pneg %p188
      // Predicated region
      $region33: #{tpu_custom_call.1} parent=5 // pred_check
        _
      $region34: #{tpu_custom_call.1} parent=5 // pred_check_branch
        %191 = sbr.rel (%p188) target = $region36
      $region35: #{tpu_custom_call.1} parent=5 // pred_region
        %s192 = ssub.s32 %s13, 1
        %s193 = smul.u32 4, %s18
        %p194 = scmp.lt.s32.totalorder %s193, 7
        %s195 = scalar_select %p194, %s193, 7
        %s196 = smul.addr %s195, 8
        %s197 = scalar_lea.vmem %s0, %s196
        %p198 = pneg %p39
        %p199 = pneg %p36
        %p200 = pneg %p60
        %p201 = pneg %p57
        %p202 = pneg %p81
        %p203 = pneg %p78
        %p204 = pneg %p102
        %p205 = pneg %p99
        %p206 = pneg %p128
        %p207 = pneg %p125
        %s208 = smul.u32 4, %s18
        %p209 = scmp.lt.s32.totalorder %s208, 7
        %s210 = scalar_select %p209, %s208, 7
        %s211 = smul.addr %s210, 8
        %s212 = scalar_lea.vmem %s4, %s211
        %p213 = pneg %p149
        %p214 = pneg %p146
        %s215 = smul.u32 4, %s18
        %p216 = scmp.lt.s32.totalorder %s215, 7
        %s217 = scalar_select %p216, %s215, 7
        %s218 = smul.addr %s217, 8
        %s219 = scalar_lea.vmem %s0, %s218
        %s220 = smul.u32 4, %s18
        %s221 = smul.u32 4, %s18
        %p222 = scmp.lt.s32.totalorder %s221, 7
        %s223 = scalar_select %p222, %s221, 7
        %s224 = smul.addr %s223, 8
        %s225 = scalar_lea.vmem %s4, %s224
        %s226 = smul.u32 4, %s18
        %p227 = scmp.eq.s32.totalorder %s18, 0
        // Predicated region
        $region37: #{tpu_custom_call.1} parent=35 // pred_check
          %p228 = pneg %p227
        $region38: #{tpu_custom_call.1} parent=35 // pred_check_branch
          %230 = sbr.rel (%p228) target = $region40
        $region39: #{tpu_custom_call.1} parent=35 // pred_region
          %vm231 = vcmask 123904
          %232 = vst.msk [vmem:[#allocation2] sm:$0x3] %vm231, 0.0
        $region40: #{tpu_custom_call.1} parent=35 // pred_fallthru
          _
        %v233 = vld [vmem:[%s219] sm:$0xff]
        %v234 = vld [vmem:[%s219 + $0x8] sm:$0xff]
        %v235 = vld [vmem:[%s219 + $0x10] sm:$0xff]
        %v236 = vld [vmem:[%s219 + $0x18] sm:$0xff]
        %v237 = vld [vmem:[%s1] sm:$0xff]
        %v238 = vld [vmem:[%s1 + $0x8] sm:$0xff]
        %v239 = vld [vmem:[%s1 + $0x10] sm:$0xff]
        %v240 = vld [vmem:[%s1 + $0x18] sm:$0xff]
        %vm241 = vcmask 261120
        %v243 = vsel %vm241, %v233, 0
        %v246 = vsel %vm241, %v234, 0
        %v249 = vsel %vm241, %v235, 0
        %v252 = vsel %vm241, %v236, 0
        %254 = vmatprep.subr.mxu0 0.0
        %255 = vmatpush1.msra.mxu0 %v237
        %256 = vmatprep.subr.mxu0 0.0
        %257 = vmatpush1.msra.mxu0 %v238
        %258 = vmatprep.subr.mxu0 0.0
        %259 = vmatpush1.msra.mxu0 %v239
        %260 = vmatprep.subr.mxu0 0.0
        %261 = vmatpush1.msra.mxu0 %v240
        %262 = vmatprep.subr.mxu0 0.0
        %263 = vmatpush1.msra.mxu0 0.0
        %264 = vmatprep.subr.mxu0 0.0
        %265 = vmatpush1.msra.mxu0 0.0
        %266 = vmatprep.subr.mxu0 0.0
        %267 = vmatpush1.msra.mxu0 0.0
        %268 = vmatprep.subr.mxu0 0.0
        %269 = vmatpush1.msra.mxu0 0.0
        %270 = vmatprep.subr.mxu0 0.0
        %271 = vmatpush1.msra.mxu0 0.0
        %272 = vmatprep.subr.mxu0 0.0
        %273 = vmatpush1.msra.mxu0 0.0
        %274 = vmatprep.subr.mxu0 0.0
        %275 = vmatpush1.msra.mxu0 0.0
        %276 = vmatprep.subr.mxu0 0.0
        %277 = vmatpush1.msra.mxu0 0.0
        %278 = vmatprep.subr.mxu0 0.0
        %279 = vmatpush1.msra.mxu0 0.0
        %280 = vmatprep.subr.mxu0 0.0
        %281 = vmatpush1.msra.mxu0 0.0
        %282 = vmatprep.subr.mxu0 0.0
        %283 = vmatpush1.msra.mxu0 0.0
        %284 = vmatprep.subr.mxu0 0.0
        %285 = vmatpush1.msra.mxu0 0.0
        %286 = vmatprep.subr.mxu0 0.0
        %287 = vmatpush1.msra.mxu0 0.0
        %288 = vmatprep.subr.mxu0 0.0
        %289 = vmatpush1.msra.mxu0 0.0
        %290 = vmatprep.subr.mxu0 0.0
        %291 = vmatpush1.msra.mxu0 0.0
        %292 = vmatprep.subr.mxu0 0.0
        %293 = vmatpush1.msra.mxu0 0.0
        %294 = vmatprep.subr.mxu0 0.0
        %295 = vmatpush1.msra.mxu0 0.0
        %296 = vmatprep.subr.mxu0 0.0
        %297 = vmatpush1.msra.mxu0 0.0
        %298 = vmatprep.subr.mxu0 0.0
        %299 = vmatpush1.msra.mxu0 0.0
        %300 = vmatprep.subr.mxu0 0.0
        %301 = vmatpush1.msra.mxu0 0.0
        %302 = vmatprep.subr.mxu0 0.0
        %303 = vmatpush1.msra.mxu0 0.0
        %304 = vmatprep.subr.mxu0 0.0
        %305 = vmatpush1.msra.mxu0 0.0
        %306 = vmatprep.subr.mxu0 0.0
        %307 = vmatpush1.msra.mxu0 0.0
        %308 = vmatprep.subr.mxu0 0.0
        %309 = vmatpush1.msra.mxu0 0.0
        %310 = vmatprep.subr.mxu0 0.0
        %311 = vmatpush1.msra.mxu0 0.0
        %312 = vmatprep.subr.mxu0 0.0
        %313 = vmatpush1.msra.mxu0 0.0
        %314 = vmatprep.subr.mxu0 0.0
        %315 = vmatpush1.msra.mxu0 0.0
        %316 = vmatprep.subr.mxu0 0.0
        %317 = vmatpush1.msra.mxu0 0.0
        %318 = vmatprep.mubr.f32.mxu0 0.0
        %319 = vmatmul.mubr.f32.gmra.mrb[0].mxu0 %v243
        %v320 = vpop.f32.mrb[0].mxu0
        %v321 = vadd.f32 0.0, %v320
        %v322 = vpop.f32.mrb[0].mxu0
        %323 = vmatprep.mubr.f32.mxu0 0.0
        %324 = vmatmul.mubr.f32.gmra.mrb[0].mxu0 %v246
        %v325 = vpop.f32.mrb[0].mxu0
        %v326 = vadd.f32 0.0, %v325
        %v327 = vpop.f32.mrb[0].mxu0
        %328 = vmatprep.mubr.f32.mxu0 0.0
        %329 = vmatmul.mubr.f32.gmra.mrb[0].mxu0 %v249
        %v330 = vpop.f32.mrb[0].mxu0
        %v331 = vadd.f32 0.0, %v330
        %v332 = vpop.f32.mrb[0].mxu0
        %333 = vmatprep.mubr.f32.mxu0 0.0
        %334 = vmatmul.mubr.f32.gmra.mrb[0].mxu0 %v252
        %v335 = vpop.f32.mrb[0].mxu0
        %v336 = vadd.f32 0.0, %v335
        %v337 = vpop.f32.mrb[0].mxu0
        %338 = vdwg.mxu0
        %vm339 = vcmask 130048
        %340 = vst.msk [vmem:[%s225] sm:$0xff] %vm339, %v321
        %341 = vst.msk [vmem:[%s225 + $0x8] sm:$0xff] %vm339, %v326
        %342 = vst.msk [vmem:[%s225 + $0x10] sm:$0xff] %vm339, %v331
        %343 = vst.msk [vmem:[%s225 + $0x18] sm:$0xff] %vm339, %v336
        %v344 = vsel %vm339, %v321, 0.0
        %v345 = vsel %vm339, %v326, 0.0
        %v346 = vadd.f32 %v344, %v345
        %v347 = vsel %vm339, %v331, 0.0
        %v348 = vadd.f32 %v346, %v347
        %v349 = vsel %vm339, %v336, 0.0
        %v350 = vadd.f32 %v348, %v349
        %v351 = vrot.slane %v350, 4
        %v352 = vadd.f32 %v350, %v351
        %v353 = vrot.slane %v352, 2
        %v354 = vadd.f32 %v352, %v353
        %v355 = vrot.slane %v354, 1
        %v356 = vadd.f32 %v354, %v355
        %v357 = vmul.f32 %v321, %v321
        %v358 = vmul.f32 %v326, %v326
        %v359 = vmul.f32 %v331, %v331
        %v360 = vmul.f32 %v336, %v336
        %v361 = vsel %vm339, %v357, 0.0
        %v362 = vsel %vm339, %v358, 0.0
        %v363 = vadd.f32 %v361, %v362
        %v364 = vsel %vm339, %v359, 0.0
        %v365 = vadd.f32 %v363, %v364
        %v366 = vsel %vm339, %v360, 0.0
        %v367 = vadd.f32 %v365, %v366
        %v368 = vrot.slane %v367, 4
        %v369 = vadd.f32 %v367, %v368
        %v370 = vrot.slane %v369, 2
        %v371 = vadd.f32 %v369, %v370
        %v372 = vrot.slane %v371, 1
        %v373 = vadd.f32 %v371, %v372
        %v374 = vld [vmem:[#allocation2] sm:$0x3]
        %vm375 = vcmask 1040384
        %v376 = vsel %vm375, %v356, %v373
        %v377 = vadd.f32 %v374, %v376
        %vm378 = vcmask 123904
        %379 = vst.msk [vmem:[#allocation2] sm:$0x3] %vm378, %v377
        %p380 = scmp.eq.s32.totalorder %s18, 1
        // Predicated region
        $region41: #{tpu_custom_call.1} parent=35 // pred_check
          %p381 = pneg %p380
        $region42: #{tpu_custom_call.1} parent=35 // pred_check_branch
          %383 = sbr.rel (%p381) target = $region44
        $region43: #{tpu_custom_call.1} parent=35 // pred_region
          %v384 = vld [vmem:[#allocation2] sm:$0x3]
          %v385 = vmul.f32 %v384, 0.015625
          %v386 = vmul.f32 %v385, %v385
          %v388 = vrot.slane %v386, 7
          %v390 = vsub.f32 %v385, %v388
          %v391 = vadd.f32 %v390, 1e-05
          %v392 = vrsqrt.pop %v391
          %v393 = vld [vmem:[%s2] sm:$0x1]
          %v396 = vunpack.c.l.s4 1966171168
          %v397 = vunpack.c.0.s8 %v396
          %v398 = vlaneseq
          %v399 = vshrl.u32 %v398, 7
          %v400 = vsub.s32 %v397, %v399
          %v401 = vrot.slane %v392, %v400
          %v402 = vcombine.high %v401, %v401
          %v404 = vunpack.c.l.s4 1966171168
          %v405 = vunpack.c.0.s8 %v404
          %v406 = vlaneseq
          %v407 = vshrl.u32 %v406, 7
          %v408 = vsub.s32 %v405, %v407
          %v409 = vrot.slane %v402, %v408
          %v411 = vmul.f32 %v393, %v409
          %v412 = vld [vmem:[%s3] sm:$0x1]
          %v413 = vmul.f32 %v385, %v411
          %v414 = vsub.f32 %v412, %v413
          %v416 = vlaneseq
          %v417 = vshrl.u32 %v416, 7
          %v418 = vsub.s32 0, %v417
          %v419 = vrot.slane %v414, %v418
          %v421 = vsel %vm375, %v411, %v419
          %422 = vst.msk [vmem:[#allocation3] sm:$0x3] %vm378, %v421
        $region44: #{tpu_custom_call.1} parent=35 // pred_fallthru
          _
        %s423 = smul.u32 4, %s18
        %p424 = scmp.lt.s32.totalorder %s423, 7
        %s425 = scalar_select %p424, %s423, 7
        %s426 = smul.addr %s425, 8
        %s427 = scalar_lea.vmem %s4, %s426
        // Predicated region
        $region45: #{tpu_custom_call.1} parent=35 // pred_check
          %p428 = pneg %p125
        $region46: #{tpu_custom_call.1} parent=35 // pred_check_branch
          %430 = sbr.rel (%p428) target = $region48
        $region47: #{tpu_custom_call.1} parent=35 // pred_region
          %s431 = smul.u32 4, %s18
        $region48: #{tpu_custom_call.1} parent=35 // pred_fallthru
          _
        // Predicated region
        $region49: #{tpu_custom_call.1} parent=35 // pred_check
          %p432 = pneg %p146
        $region50: #{tpu_custom_call.1} parent=35 // pred_check_branch
          %434 = sbr.rel (%p432) target = $region52
        $region51: #{tpu_custom_call.1} parent=35 // pred_region
          %s436 = ssub.s32 32, 32
          %437 = vsyncadd [#allocation4], %s436
          %s439 = sshll.u32 [#allocation3], 4
          %s440 = int_to_ptr.vmem [resolvable:$true] %s439
          %442 = dma.vmem_to_hbm [thread:$0]  %s440, 32, %s5, [#allocation4]
        $region52: #{tpu_custom_call.1} parent=35 // pred_fallthru
          _
        // Predicated region
        $region53: #{tpu_custom_call.1} parent=35 // pred_check
          %p443 = pneg %p146
        $region54: #{tpu_custom_call.1} parent=35 // pred_check_branch
          %445 = sbr.rel (%p443) target = $region56
        $region55: #{tpu_custom_call.1} parent=35 // pred_region
          %446 = dma.done [#allocation4], 32
        $region56: #{tpu_custom_call.1} parent=35 // pred_fallthru
          _
      $region36: #{tpu_custom_call.1} parent=5 // pred_fallthru
        _
      %p447 = scmp.le.s32.totalorder 2, %s13
      // Predicated region
      $region57: #{tpu_custom_call.1} parent=5 // pred_check
        %p448 = pneg %p447
      $region58: #{tpu_custom_call.1} parent=5 // pred_check_branch
        %450 = sbr.rel (%p448) target = $region60
      $region59: #{tpu_custom_call.1} parent=5 // pred_region
        %s451 = ssub.s32 %s13, 2
        // Predicated region
        $region61: #{tpu_custom_call.1} parent=59 // pred_check
          %p452 = pneg %p131
        $region62: #{tpu_custom_call.1} parent=59 // pred_check_branch
          %454 = sbr.rel (%p452) target = $region64
        $region63: #{tpu_custom_call.1} parent=59 // pred_region
          %s455 = smul.u32 4, %s19
          %p456 = scmp.lt.s32.totalorder %s455, 7
          %s457 = scalar_select %p456, %s455, 7
          %s458 = smul.addr %s457, 8
          %s459 = scalar_lea.vmem %s4, %s458
        $region64: #{tpu_custom_call.1} parent=59 // pred_fallthru
          _
      $region60: #{tpu_custom_call.1} parent=5 // pred_fallthru
        _
    $region6: #{tpu_custom_call.1} parent=1 // loop_footer
      %s17 = sadd.s32 1, %s13
    $region7: #{tpu_custom_call.1} parent=1 // loop_footer_branch
      %12 = sbr.rel target = $region3
    $region8: #{tpu_custom_call.1} parent=1 // loop_exit
      _
    %460 = vsyncpa [#allocation4], 1
    %s461 = scalar_lea.sflag [#allocation4], 1
    %462 = vsyncpa %s461, 1

</llo_original>
